<compile_context>
chip_gen: v5e
topology: v5e:2x2
jax: 0.10.0
libtpu: 0.0.40
codegen_flags: <defaults>
</compile_context>

<pallas_src>
import functools

import jax
import jax.numpy as jnp
from jax.experimental import pallas as pl
from jax.experimental.pallas import tpu as pltpu

_LANE = 128


def _round_up(x, m):
    return ((x + m - 1) // m) * m


def _sublane(itemsize):
    # Native packed second-minor tile per dtype width.
    return {4: 8, 2: 16, 1: 32}.get(itemsize, 8)


def _vmem_capacity_bytes():
    try:
        return int(pltpu.get_tpu_info().vmem_capacity_bytes)
    except Exception:
        return 64 << 20  # v7x-safe fallback


def _kernel_replicated(self_ref, neigh_ref, ws_ref, wn_ref, o_ref):
    # (self + sum_k neigh_k)/(K+1) @ W
    #   == self @ (W/(K+1)) + neigh_flat @ (tile(W,(K,1))/(K+1))
    # K-sum runs on the MXU via the replicated-weight contraction (K*C_in).
    acc = jnp.dot(self_ref[...], ws_ref[...], preferred_element_type=jnp.float32)
    acc = acc + jnp.dot(neigh_ref[...], wn_ref[...],
                        preferred_element_type=jnp.float32)
    o_ref[...] = jnp.maximum(acc, 0.0).astype(o_ref.dtype)


def _kernel_vpu_sum(self_ref, neigh_ref, w_ref, o_ref, *, k, c_in):
    # Lane-aligned C_in: sum the K neighbors with VPU adds over lane-aligned
    # slices (idle VALU slots in this mem-bound kernel), then one matmul
    # against the un-replicated W/(K+1).
    s = self_ref[...].astype(jnp.float32)
    for kk in range(k):
        s = s + neigh_ref[:, kk * c_in:(kk + 1) * c_in].astype(jnp.float32)
    acc = jnp.dot(s.astype(w_ref.dtype), w_ref[...],
                  preferred_element_type=jnp.float32)
    o_ref[...] = jnp.maximum(acc, 0.0).astype(o_ref.dtype)


def _choose_tile_co(c_out):
    # Tile C_out only when it is wide and 128-aligned; otherwise keep the full
    # (possibly non-128-multiple) width and accept masked stores on the tail.
    if c_out <= 512 or c_out % _LANE != 0:
        return c_out
    for cand in (512, 384, 256, 128):
        if c_out % cand == 0:
            return cand
    return c_out


def _choose_tile_n(n, per_row_bytes, fixed_bytes, budget, sub, cap):
    avail = max(budget - fixed_bytes, 0)
    t_budget = (avail // max(per_row_bytes, 1)) // sub * sub
    t = min(max(t_budget, sub), cap, _round_up(n, sub))
    # Ensure >= 2 grid steps along N when possible so v7x's two TensorCores
    # both get work under dimension_semantics=("parallel", ...).
    if t >= n and n > sub:
        t = _round_up(pl.cdiv(n, 2), sub)
    return t


def gcn_aggregator(self_vecs, neigh_vecs, weight, *, max_tile_n=2048,
                   vmem_budget_bytes=None):
    """GCNAggregator.forward (dropout=0.0, bias=False, act=ReLU)."""
    N, C_in = self_vecs.shape
    Nn, K, C_in2 = neigh_vecs.shape
    assert Nn == N and C_in2 == C_in and K >= 1
    C_in_w, C_out = weight.shape
    assert C_in_w == C_in
    dtype = self_vecs.dtype
    itemsize = jnp.dtype(dtype).itemsize
    sub = _sublane(itemsize)

    # Fold the 1/(K+1) mean into the weights.
    inv = 1.0 / float(K + 1)
    w_scaled = (weight.astype(jnp.float32) * inv).astype(dtype)   # (C_in, C_out)

    # Lane-dense neighbor rows (trailing-dim merge; no data movement).
    neigh2d = neigh_vecs.reshape(N, K * C_in)

    # Variant selection: replicate W along the contraction (K-sum on the MXU)
    # only for small / unaligned C_in; lane-aligned C_in sums on the VPU.
    use_vpu_sum = (C_in % _LANE == 0)

    tile_co = _choose_tile_co(C_out)
    n_co = pl.cdiv(C_out, tile_co)

    # Per-generation VMEM budget (v5e/v6e: 128 MiB -> ~96; v7x: 64 MiB -> 48).
    capacity = _vmem_capacity_bytes()
    if vmem_budget_bytes is None:
        vmem_budget_bytes = int(0.75 * capacity)

    # Footprint accounting (weights conservatively counted double-buffered so
    # the Buffered(1) fallback path below can never OOM).
    w_rows = C_in if use_vpu_sum else (K + 1) * C_in
    fixed_bytes = 2 * itemsize * w_rows * tile_co + (2 << 20)
    per_row_bytes = (
        2 * itemsize * (C_in + K * C_in)      # double-buffered activations
        + 2 * itemsize * tile_co              # double-buffered output block
        + 4 * (tile_co + C_in))               # f32 accumulator / sum temps
    tile_n = _choose_tile_n(N, per_row_bytes, fixed_bytes, vmem_budget_bytes,
                            sub, max_tile_n)
    n_rows = pl.cdiv(N, tile_n)
    grid = (n_rows, n_co)

    footprint = fixed_bytes + tile_n * per_row_bytes
    vmem_limit = int(min(max(footprint, 32 << 20),
                         max(capacity - (4 << 20), 32 << 20),
                         128 << 20))

    mxu_flops = 2 * N * (C_in if use_vpu_sum else (K + 1) * C_in) * C_out
    w_elems = w_rows * C_out * (n_rows if n_co > 1 else 1)
    cost = pl.CostEstimate(
        flops=int(mxu_flops + N * K * C_in),
        transcendentals=0,
        bytes_accessed=int(itemsize * (N * (K + 1) * C_in + N * C_out + w_elems)),
    )

    out_shape = jax.ShapeDtypeStruct((N, C_out), dtype)
    compiler_params = pltpu.CompilerParams(
        dimension_semantics=("parallel", "parallel"),
        vmem_limit_bytes=vmem_limit,
    )

    act_specs = [
        pl.BlockSpec((tile_n, C_in), lambda i, j: (i, 0)),
        pl.BlockSpec((tile_n, K * C_in), lambda i, j: (i, 0)),
    ]
    out_spec = pl.BlockSpec((tile_n, tile_co), lambda i, j: (i, j))

    if use_vpu_sum:
        kernel = functools.partial(_kernel_vpu_sum, k=K, c_in=C_in)
        w_args = (w_scaled,)
        w_shapes = ((C_in, tile_co),)
    else:
        w_neigh = jnp.tile(w_scaled, (K, 1))                      # (K*C_in, C_out)
        kernel = _kernel_replicated
        w_args = (w_scaled, w_neigh)
        w_shapes = ((C_in, tile_co), (K * C_in, tile_co))

    def run(single_buffer_weights):
        if single_buffer_weights:
            w_specs = [pl.BlockSpec(shp, lambda i, j: (0, j),
                                    pipeline_mode=pl.Buffered(1))
                       for shp in w_shapes]
        else:
            w_specs = [pl.BlockSpec(shp, lambda i, j: (0, j))
                       for shp in w_shapes]
        return pl.pallas_call(
            kernel,
            out_shape=out_shape,
            grid_spec=pltpu.PrefetchScalarGridSpec(
                num_scalar_prefetch=0,
                grid=grid,
                in_specs=act_specs + w_specs,
                out_specs=out_spec,
            ),
            compiler_params=compiler_params,
            cost_estimate=cost,
        )(self_vecs, neigh2d, *w_args)

    # Weights are grid-invariant when C_out is not tiled: single-buffer them to
    # halve their VMEM footprint.  Fall back to default double-buffering if the
    # installed Pallas rejects Buffered(1) on pallas_call pipelines.
    if n_co == 1:
        try:
            return run(True)
        except Exception:
            pass
    return run(False)


def reference(self_vecs, neigh_vecs, weight):
    means = jnp.mean(
        jnp.concatenate([self_vecs[:, None, :], neigh_vecs], axis=1), axis=1
    )
    return jax.nn.relu(means @ weight)


if __name__ == "__main__":
    key = jax.random.PRNGKey(0)

    def run_case(n, k, c_in, c_out, case_key):
        k1, k2, k3 = jax.random.split(case_key, 3)
        self_vecs = jax.random.normal(k1, (n, c_in), dtype=jnp.float32)
        neigh_vecs = jax.random.normal(k2, (n, k, c_in), dtype=jnp.float32)
        # Deterministic xavier_normal_ init: std = sqrt(2 / (fan_in + fan_out)).
        xavier_std = (2.0 / (c_in + c_out)) ** 0.5
        weight = xavier_std * jax.random.normal(k3, (c_in, c_out),
                                                dtype=jnp.float32)
        # bias=False, dropout=0.0 (module defaults) -> no bias term, no RNG.
        out = jax.block_until_ready(gcn_aggregator(self_vecs, neigh_vecs, weight))
        ref = reference(self_vecs, neigh_vecs, weight)
        assert out.shape == (n, c_out)
        assert jnp.allclose(out, ref, atol=1e-4, rtol=1e-5), (
            f"mismatch vs reference (N={n}, K={k}, C_in={c_in}, C_out={c_out})")

    key1, key2 = jax.random.split(key)
    # Replicated-weight MXU-sum variant (small, lane-unaligned C_in).
    run_case(128, 8, 32, 64, key1)
    # VPU-sum variant (lane-aligned C_in) with a ragged tail block along N.
    run_case(70, 4, 128, 96, key2)

    print("KERNEL_OK")
</pallas_src>

<mosaic_0001>
module attributes {stable_mosaic.version = 11 : i64} {
  func.func @_kernel_replicated(%arg0: i32, %arg1: i32, %arg2: memref<64x32xf32, #tpu.memory_space<vmem>>, %arg3: memref<64x256xf32, #tpu.memory_space<vmem>>, %arg4: memref<32x64xf32, #tpu.memory_space<vmem>>, %arg5: memref<256x64xf32, #tpu.memory_space<vmem>>, %arg6: memref<64x64xf32, #tpu.memory_space<vmem>>) attributes {dimension_semantics = [#tpu.dimension_semantics<parallel>, #tpu.dimension_semantics<parallel>], iteration_bounds = array<i64: 2, 1>, scalar_prefetch = 0 : i64, scratch_operands = 0 : i64, tpu.core_type = #tpu.core_type<tc>, window_params = [{transform_indices = @transform_0, window_bounds = array<i64: 64, 32>}, {transform_indices = @transform_1, window_bounds = array<i64: 64, 256>}, {pipeline_mode = #tpu.pipeline_mode<synchronous>, transform_indices = @transform_2, window_bounds = array<i64: 32, 64>}, {pipeline_mode = #tpu.pipeline_mode<synchronous>, transform_indices = @transform_3, window_bounds = array<i64: 256, 64>}, {transform_indices = @transform_4, window_bounds = array<i64: 64, 64>}]} {
    %c0 = arith.constant 0 : index
    %c0_0 = arith.constant 0 : index
    %0 = vector.load %arg2[%c0, %c0_0] : memref<64x32xf32, #tpu.memory_space<vmem>>, vector<64x32xf32>
    %c0_1 = arith.constant 0 : index
    %c0_2 = arith.constant 0 : index
    %1 = vector.load %arg4[%c0_1, %c0_2] : memref<32x64xf32, #tpu.memory_space<vmem>>, vector<32x64xf32>
    %cst = arith.constant dense<0.000000e+00> : vector<64x64xf32>
    %2 = tpu.matmul %0, %1, %cst {dimension_numbers = #tpu.dot_dimension_numbers<[1], [0], [0], [1], [0, 0, 1, 1], [], []>} : vector<64x32xf32>, vector<32x64xf32>, vector<64x64xf32> -> vector<64x64xf32>
    %c0_3 = arith.constant 0 : index
    %c0_4 = arith.constant 0 : index
    %3 = vector.load %arg3[%c0_3, %c0_4] : memref<64x256xf32, #tpu.memory_space<vmem>>, vector<64x256xf32>
    %c0_5 = arith.constant 0 : index
    %c0_6 = arith.constant 0 : index
    %4 = vector.load %arg5[%c0_5, %c0_6] : memref<256x64xf32, #tpu.memory_space<vmem>>, vector<256x64xf32>
    %cst_7 = arith.constant dense<0.000000e+00> : vector<64x64xf32>
    %5 = tpu.matmul %3, %4, %cst_7 {dimension_numbers = #tpu.dot_dimension_numbers<[1], [0], [0], [1], [0, 0, 1, 1], [], []>} : vector<64x256xf32>, vector<256x64xf32>, vector<64x64xf32> -> vector<64x64xf32>
    %6 = arith.addf %2, %5 : vector<64x64xf32>
    %cst_8 = arith.constant 0.000000e+00 : f32
    %7 = vector.broadcast %cst_8 : f32 to vector<64x64xf32>
    %8 = arith.maximumf %6, %7 : vector<64x64xf32>
    %c0_9 = arith.constant 0 : index
    %c0_10 = arith.constant 0 : index
    %9 = vector.load %arg6[%c0_9, %c0_10] : memref<64x64xf32, #tpu.memory_space<vmem>>, vector<64x64xf32>
    tpu.vector_store %arg6[%c0_9, %c0_10], %8 {strides = array<i32>} : memref<64x64xf32, #tpu.memory_space<vmem>>, vector<64x64xf32>,
    return
  }
  func.func @transform_0(%arg0: i32, %arg1: i32) -> (i32, i32) {
    %c0_i32 = arith.constant 0 : i32
    %c0_i32_0 = arith.constant 0 : i32
    return %arg0, %c0_i32 : i32, i32
  }
  func.func @transform_1(%arg0: i32, %arg1: i32) -> (i32, i32) {
    %c0_i32 = arith.constant 0 : i32
    %c0_i32_0 = arith.constant 0 : i32
    return %arg0, %c0_i32 : i32, i32
  }
  func.func @transform_2(%arg0: i32, %arg1: i32) -> (i32, i32) {
    %c0_i32 = arith.constant 0 : i32
    %c0_i32_0 = arith.constant 0 : i32
    return %c0_i32, %arg1 : i32, i32
  }
  func.func @transform_3(%arg0: i32, %arg1: i32) -> (i32, i32) {
    %c0_i32 = arith.constant 0 : i32
    %c0_i32_0 = arith.constant 0 : i32
    return %c0_i32, %arg1 : i32, i32
  }
  func.func @transform_4(%arg0: i32, %arg1: i32) -> (i32, i32) {
    %c0_i32 = arith.constant 0 : i32
    return %arg0, %arg1 : i32, i32
  }
}

module attributes {stable_mosaic.version = 11 : i64} {
  func.func @_kernel_replicated(%arg0: i32, %arg1: i32, %arg2: memref<64x32xf32, #tpu.memory_space<vmem>>, %arg3: memref<64x256xf32, #tpu.memory_space<vmem>>, %arg4: memref<32x64xf32, #tpu.memory_space<vmem>>, %arg5: memref<256x64xf32, #tpu.memory_space<vmem>>, %arg6: memref<64x64xf32, #tpu.memory_space<vmem>>) attributes {dimension_semantics = [#tpu.dimension_semantics<parallel>, #tpu.dimension_semantics<parallel>], iteration_bounds = array<i64: 2, 1>, scalar_prefetch = 0 : i64, scratch_operands = 0 : i64, tpu.core_type = #tpu.core_type<tc>, window_params = [{transform_indices = @transform_0, window_bounds = array<i64: 64, 32>}, {transform_indices = @transform_1, window_bounds = array<i64: 64, 256>}, {transform_indices = @transform_2, window_bounds = array<i64: 32, 64>}, {transform_indices = @transform_3, window_bounds = array<i64: 256, 64>}, {transform_indices = @transform_4, window_bounds = array<i64: 64, 64>}]} {
    %c0 = arith.constant 0 : index
    %c0_0 = arith.constant 0 : index
    %0 = vector.load %arg2[%c0, %c0_0] : memref<64x32xf32, #tpu.memory_space<vmem>>, vector<64x32xf32>
    %c0_1 = arith.constant 0 : index
    %c0_2 = arith.constant 0 : index
    %1 = vector.load %arg4[%c0_1, %c0_2] : memref<32x64xf32, #tpu.memory_space<vmem>>, vector<32x64xf32>
    %cst = arith.constant dense<0.000000e+00> : vector<64x64xf32>
    %2 = tpu.matmul %0, %1, %cst {dimension_numbers = #tpu.dot_dimension_numbers<[1], [0], [0], [1], [0, 0, 1, 1], [], []>} : vector<64x32xf32>, vector<32x64xf32>, vector<64x64xf32> -> vector<64x64xf32>
    %c0_3 = arith.constant 0 : index
    %c0_4 = arith.constant 0 : index
    %3 = vector.load %arg3[%c0_3, %c0_4] : memref<64x256xf32, #tpu.memory_space<vmem>>, vector<64x256xf32>
    %c0_5 = arith.constant 0 : index
    %c0_6 = arith.constant 0 : index
    %4 = vector.load %arg5[%c0_5, %c0_6] : memref<256x64xf32, #tpu.memory_space<vmem>>, vector<256x64xf32>
    %cst_7 = arith.constant dense<0.000000e+00> : vector<64x64xf32>
    %5 = tpu.matmul %3, %4, %cst_7 {dimension_numbers = #tpu.dot_dimension_numbers<[1], [0], [0], [1], [0, 0, 1, 1], [], []>} : vector<64x256xf32>, vector<256x64xf32>, vector<64x64xf32> -> vector<64x64xf32>
    %6 = arith.addf %2, %5 : vector<64x64xf32>
    %cst_8 = arith.constant 0.000000e+00 : f32
    %7 = vector.broadcast %cst_8 : f32 to vector<64x64xf32>
    %8 = arith.maximumf %6, %7 : vector<64x64xf32>
    %c0_9 = arith.constant 0 : index
    %c0_10 = arith.constant 0 : index
    %9 = vector.load %arg6[%c0_9, %c0_10] : memref<64x64xf32, #tpu.memory_space<vmem>>, vector<64x64xf32>
    tpu.vector_store %arg6[%c0_9, %c0_10], %8 {strides = array<i32>} : memref<64x64xf32, #tpu.memory_space<vmem>>, vector<64x64xf32>,
    return
  }
  func.func @transform_0(%arg0: i32, %arg1: i32) -> (i32, i32) {
    %c0_i32 = arith.constant 0 : i32
    %c0_i32_0 = arith.constant 0 : i32
    return %arg0, %c0_i32 : i32, i32
  }
  func.func @transform_1(%arg0: i32, %arg1: i32) -> (i32, i32) {
    %c0_i32 = arith.constant 0 : i32
    %c0_i32_0 = arith.constant 0 : i32
    return %arg0, %c0_i32 : i32, i32
  }
  func.func @transform_2(%arg0: i32, %arg1: i32) -> (i32, i32) {
    %c0_i32 = arith.constant 0 : i32
    %c0_i32_0 = arith.constant 0 : i32
    return %c0_i32, %arg1 : i32, i32
  }
  func.func @transform_3(%arg0: i32, %arg1: i32) -> (i32, i32) {
    %c0_i32 = arith.constant 0 : i32
    %c0_i32_0 = arith.constant 0 : i32
    return %c0_i32, %arg1 : i32, i32
  }
  func.func @transform_4(%arg0: i32, %arg1: i32) -> (i32, i32) {
    %c0_i32 = arith.constant 0 : i32
    return %arg0, %arg1 : i32, i32
  }
}

</mosaic_0001>

<llo_original>
// kernel: tpu_custom_call.1
$region0: #{tpu_custom_call.1}
  #allocation0 [shape = 'u32[]', space=smem, size = 0x4, offset = 0x4, fixed_abs, tag = 'smem constant byte address 0x4 - core index']
  #allocation1 [shape = 'u32[72,128]{1,0:T(1,128)}', space=vmem, size = 0x9000, scoped, tag = 'internal scratch']
  %s0 = inlined_call_operand.vmem [shape: f32[128,32], index: 0, kind: input, shape index: {}]
  %s1 = inlined_call_operand.vmem [shape: f32[128,256], index: 1, kind: input, shape index: {}]
  %s2 = inlined_call_operand.vmem [shape: f32[32,64], index: 2, kind: input, shape index: {}]
  %s3 = inlined_call_operand.vmem [shape: f32[256,64], index: 3, kind: input, shape index: {}]
  %s4 = inlined_call_operand.vmem [shape: f32[128,64], index: 4, kind: output, shape index: {}]
  %s5 = sld [smem:[#allocation0]]
  $region49: #{tpu_custom_call.1} parent=0
    _
  %s7 = ssub.s32 1, %s5
  %s8 = scalar_select 0, %s7, %s5
  loop: start=0, step=1, limit=4
  $region2: #{tpu_custom_call.1} parent=0 // loop_pre_header
    _
  $region3: #{tpu_custom_call.1} parent=0 // loop_header
    %s10 = sphi 0, %s14
    %p11 = scmp.ge.s32.totalorder %s10, 4
    %s17 = sphi 0, %s29
    %s18 = sphi 0, %s25
    %s19 = sphi 0, %s17
    %s20 = sphi 0, %s18
    %s21 = sphi 0, %s19
    %s22 = sphi 0, %s20
    %s32 = sphi 0, %s34
    %s35 = sphi 0, %s32
    %s36 = sphi 0, %s35
    %s52 = sphi 0, %s36
    %s58 = sphi 0, %s60
    %s61 = sphi 0, %s58
    %s62 = sphi 0, %s61
    %s78 = sphi 0, %s62
    %s84 = sphi 0, %s86
    %s87 = sphi 0, %s84
    %s88 = sphi 0, %s87
    %s104 = sphi 0, %s88
    %s110 = sphi 0, %s112
    %s113 = sphi 0, %s110
    %s114 = sphi 0, %s113
    %s130 = sphi 0, %s114
    %s138 = sphi 0, %s140
    %s141 = sphi 0, %s138
    %s142 = sphi 0, %s141
    %s158 = sphi 0, %s142
  $region4: #{tpu_custom_call.1} parent=0 // loop_header_branch
    %13 = sbr.rel (%p11) target = $region8
  $region5: #{tpu_custom_call.1} parent=0 // loop_body
    %s15 = ssub.s32 %s10, 1
    %s16 = ssub.s32 %s10, 2
    %s23 = sadd.s32 1, %s18
    %p24 = scmp.ge.s32.totalorder %s23, 1
    %s25 = scalar_select %p24, 0, %s23
    %s26 = sadd.s32 1, %s17
    %s27 = scalar_select %p24, %s26, %s17
    %p28 = scmp.ge.s32.totalorder %s27, 2
    %s29 = scalar_select %p28, 0, %s27
    %s30 = ssub.s32 %s17, %s29
    %p31 = scmp.eq.s32.totalorder %s30, 0
    %s33 = sadd.s32 %s32, 1
    %s34 = scalar_select %p31, %s32, %s33
    %p37 = pneg %p31
    %p38 = scmp.eq.s32.totalorder %s10, 1
    %p39 = por %p37, %p38
    %p40 = scmp.ne.s32.totalorder %s32, %s35
    %p41 = scmp.eq.s32.totalorder %s10, 0
    %p42 = por %p40, %p41
    %p43 = scmp.ne.s32.totalorder %s32, %s35
    %p44 = scmp.eq.s32.totalorder %s15, 1
    %p45 = por %p43, %p44
    %p46 = scmp.ne.s32.totalorder %s35, %s36
    %p47 = scmp.eq.s32.totalorder %s15, 0
    %p48 = por %p46, %p47
    %p49 = scmp.ne.s32.totalorder %s35, %s36
    %p50 = scmp.eq.s32.totalorder %s16, 1
    %p51 = por %p49, %p50
    %p53 = scmp.ne.s32.totalorder %s36, %s52
    %p54 = scmp.eq.s32.totalorder %s16, 0
    %p55 = por %p53, %p54
    %s56 = ssub.s32 %s17, %s29
    %p57 = scmp.eq.s32.totalorder %s56, 0
    %s59 = sadd.s32 %s58, 1
    %s60 = scalar_select %p57, %s58, %s59
    %p63 = pneg %p57
    %p64 = scmp.eq.s32.totalorder %s10, 1
    %p65 = por %p63, %p64
    %p66 = scmp.ne.s32.totalorder %s58, %s61
    %p67 = scmp.eq.s32.totalorder %s10, 0
    %p68 = por %p66, %p67
    %p69 = scmp.ne.s32.totalorder %s58, %s61
    %p70 = scmp.eq.s32.totalorder %s15, 1
    %p71 = por %p69, %p70
    %p72 = scmp.ne.s32.totalorder %s61, %s62
    %p73 = scmp.eq.s32.totalorder %s15, 0
    %p74 = por %p72, %p73
    %p75 = scmp.ne.s32.totalorder %s61, %s62
    %p76 = scmp.eq.s32.totalorder %s16, 1
    %p77 = por %p75, %p76
    %p79 = scmp.ne.s32.totalorder %s62, %s78
    %p80 = scmp.eq.s32.totalorder %s16, 0
    %p81 = por %p79, %p80
    %s82 = ssub.s32 %s18, %s25
    %p83 = scmp.eq.s32.totalorder %s82, 0
    %s85 = sadd.s32 %s84, 1
    %s86 = scalar_select %p83, %s84, %s85
    %p89 = pneg %p83
    %p90 = scmp.eq.s32.totalorder %s10, 1
    %p91 = por %p89, %p90
    %p92 = scmp.ne.s32.totalorder %s84, %s87
    %p93 = scmp.eq.s32.totalorder %s10, 0
    %p94 = por %p92, %p93
    %p95 = scmp.ne.s32.totalorder %s84, %s87
    %p96 = scmp.eq.s32.totalorder %s15, 1
    %p97 = por %p95, %p96
    %p98 = scmp.ne.s32.totalorder %s87, %s88
    %p99 = scmp.eq.s32.totalorder %s15, 0
    %p100 = por %p98, %p99
    %p101 = scmp.ne.s32.totalorder %s87, %s88
    %p102 = scmp.eq.s32.totalorder %s16, 1
    %p103 = por %p101, %p102
    %p105 = scmp.ne.s32.totalorder %s88, %s104
    %p106 = scmp.eq.s32.totalorder %s16, 0
    %p107 = por %p105, %p106
    %s108 = ssub.s32 %s18, %s25
    %p109 = scmp.eq.s32.totalorder %s108, 0
    %s111 = sadd.s32 %s110, 1
    %s112 = scalar_select %p109, %s110, %s111
    %p115 = pneg %p109
    %p116 = scmp.eq.s32.totalorder %s10, 1
    %p117 = por %p115, %p116
    %p118 = scmp.ne.s32.totalorder %s110, %s113
    %p119 = scmp.eq.s32.totalorder %s10, 0
    %p120 = por %p118, %p119
    %p121 = scmp.ne.s32.totalorder %s110, %s113
    %p122 = scmp.eq.s32.totalorder %s15, 1
    %p123 = por %p121, %p122
    %p124 = scmp.ne.s32.totalorder %s113, %s114
    %p125 = scmp.eq.s32.totalorder %s15, 0
    %p126 = por %p124, %p125
    %p127 = scmp.ne.s32.totalorder %s113, %s114
    %p128 = scmp.eq.s32.totalorder %s16, 1
    %p129 = por %p127, %p128
    %p131 = scmp.ne.s32.totalorder %s114, %s130
    %p132 = scmp.eq.s32.totalorder %s16, 0
    %p133 = por %p131, %p132
    %s134 = ssub.s32 %s17, %s29
    %s135 = ssub.s32 %s18, %s25
    %s136 = sor.u32 %s134, %s135
    %p137 = scmp.eq.s32.totalorder %s136, 0
    %s139 = sadd.s32 %s138, 1
    %s140 = scalar_select %p137, %s138, %s139
    %p143 = pneg %p137
    %p144 = scmp.eq.s32.totalorder %s10, 1
    %p145 = por %p143, %p144
    %p146 = scmp.ne.s32.totalorder %s138, %s141
    %p147 = scmp.eq.s32.totalorder %s10, 0
    %p148 = por %p146, %p147
    %p149 = scmp.ne.s32.totalorder %s138, %s141
    %p150 = scmp.eq.s32.totalorder %s15, 1
    %p151 = por %p149, %p150
    %p152 = scmp.ne.s32.totalorder %s141, %s142
    %p153 = scmp.eq.s32.totalorder %s15, 0
    %p154 = por %p152, %p153
    %p155 = scmp.ne.s32.totalorder %s141, %s142
    %p156 = scmp.eq.s32.totalorder %s16, 1
    %p157 = por %p155, %p156
    %p159 = scmp.ne.s32.totalorder %s142, %s158
    %p160 = scmp.eq.s32.totalorder %s16, 0
    %p161 = por %p159, %p160
    %p162 = scmp.le.s32.totalorder 1, %s10
    %p163 = scmp.lt.s32.totalorder %s10, 3
    %p164 = pnand %p162, %p163
    %p165 = pneg %p164
    // Predicated region
    $region9: #{tpu_custom_call.1} parent=5 // pred_check
      _
    $region10: #{tpu_custom_call.1} parent=5 // pred_check_branch
      %167 = sbr.rel (%p164) target = $region12
    $region11: #{tpu_custom_call.1} parent=5 // pred_region
      %s168 = ssub.s32 %s10, 1
      // Predicated region
      $region13: #{tpu_custom_call.1} parent=11 // pred_check
        %p169 = pneg %p100
      $region14: #{tpu_custom_call.1} parent=11 // pred_check_branch
        %171 = sbr.rel (%p169) target = $region16
      $region15: #{tpu_custom_call.1} parent=11 // pred_region
        %p172 = scmp.lt.s32.totalorder %s20, 0
        %s173 = scalar_select %p172, %s20, 0
        %s174 = smul.addr %s173, 8
        %s175 = scalar_lea.vmem %s2, %s174
      $region16: #{tpu_custom_call.1} parent=11 // pred_fallthru
        _
      // Predicated region
      $region17: #{tpu_custom_call.1} parent=11 // pred_check
        %p176 = pneg %p126
      $region18: #{tpu_custom_call.1} parent=11 // pred_check_branch
        %178 = sbr.rel (%p176) target = $region20
      $region19: #{tpu_custom_call.1} parent=11 // pred_region
        %p179 = scmp.lt.s32.totalorder %s20, 0
        %s180 = scalar_select %p179, %s20, 0
        %s181 = smul.addr %s180, 8
        %s182 = scalar_lea.vmem %s3, %s181
      $region20: #{tpu_custom_call.1} parent=11 // pred_fallthru
        _
    $region12: #{tpu_custom_call.1} parent=5 // pred_fallthru
      _
    %p183 = scmp.lt.s32.totalorder %s10, 2
    // Predicated region
    $region21: #{tpu_custom_call.1} parent=5 // pred_check
      %p184 = pneg %p183
    $region22: #{tpu_custom_call.1} parent=5 // pred_check_branch
      %186 = sbr.rel (%p184) target = $region24
    $region23: #{tpu_custom_call.1} parent=5 // pred_region
      // Predicated region
      $region25: #{tpu_custom_call.1} parent=23 // pred_check
        %p187 = pneg %p42
      $region26: #{tpu_custom_call.1} parent=23 // pred_check_branch
        %189 = sbr.rel (%p187) target = $region28
      $region27: #{tpu_custom_call.1} parent=23 // pred_region
        %s190 = smul.u32 8, %s17
        %p191 = scmp.lt.s32.totalorder %s190, 15
        %s192 = scalar_select %p191, %s190, 15
        %s193 = smul.addr %s192, 8
        %s194 = scalar_lea.vmem %s0, %s193
        %s195 = smul.u32 8, %s17
      $region28: #{tpu_custom_call.1} parent=23 // pred_fallthru
        _
      // Predicated region
      $region29: #{tpu_custom_call.1} parent=23 // pred_check
        %p196 = pneg %p68
      $region30: #{tpu_custom_call.1} parent=23 // pred_check_branch
        %198 = sbr.rel (%p196) target = $region32
      $region31: #{tpu_custom_call.1} parent=23 // pred_region
        %s199 = smul.u32 8, %s17
        %p200 = scmp.lt.s32.totalorder %s199, 15
        %s201 = scalar_select %p200, %s199, 15
        %s202 = smul.addr %s201, 2
        %s203 = smul.addr %s202, 8
        %s204 = scalar_lea.vmem %s1, %s203
        %s205 = smul.u32 8, %s17
      $region32: #{tpu_custom_call.1} parent=23 // pred_fallthru
        _
    $region24: #{tpu_custom_call.1} parent=5 // pred_fallthru
      _
    %p206 = scmp.le.s32.totalorder 1, %s10
    %p207 = scmp.lt.s32.totalorder %s10, 3
    %p208 = pnand %p206, %p207
    %p209 = pneg %p208
    // Predicated region
    $region33: #{tpu_custom_call.1} parent=5 // pred_check
      _
    $region34: #{tpu_custom_call.1} parent=5 // pred_check_branch
      %211 = sbr.rel (%p208) target = $region36
    $region35: #{tpu_custom_call.1} parent=5 // pred_region
      %s212 = ssub.s32 %s10, 1
      %s213 = smul.u32 8, %s19
      %p214 = scmp.lt.s32.totalorder %s213, 15
      %s215 = scalar_select %p214, %s213, 15
      %s216 = smul.addr %s215, 8
      %s217 = scalar_lea.vmem %s0, %s216
      %p218 = pneg %p48
      %p219 = pneg %p45
      %s220 = smul.u32 8, %s19
      %p221 = scmp.lt.s32.totalorder %s220, 15
      %s222 = scalar_select %p221, %s220, 15
      %s223 = smul.addr %s222, 2
      %s224 = smul.addr %s223, 8
      %s225 = scalar_lea.vmem %s1, %s224
      %p226 = pneg %p74
      %p227 = pneg %p71
      %p228 = scmp.lt.s32.totalorder %s20, 0
      %s229 = scalar_select %p228, %s20, 0
      %s230 = smul.addr %s229, 8
      %s231 = scalar_lea.vmem %s2, %s230
      %p232 = pneg %p100
      %p233 = pneg %p97
      %p234 = scmp.lt.s32.totalorder %s20, 0
      %s235 = scalar_select %p234, %s20, 0
      %s236 = smul.addr %s235, 8
      %s237 = scalar_lea.vmem %s3, %s236
      %p238 = pneg %p126
      %p239 = pneg %p123
      %p240 = pneg %p154
      %p241 = pneg %p151
      %s242 = smul.u32 8, %s19
      %p243 = scmp.lt.s32.totalorder %s242, 15
      %s244 = scalar_select %p243, %s242, 15
      %p245 = scmp.lt.s32.totalorder %s20, 0
      %s246 = scalar_select %p245, %s20, 0
      %s247 = sadd.s32 %s246, %s244
      %s248 = smul.addr %s247, 8
      %s249 = scalar_lea.vmem %s4, %s248
      %s250 = smul.u32 8, %s19
      %p251 = scmp.lt.s32.totalorder %s250, 15
      %s252 = scalar_select %p251, %s250, 15
      %s253 = smul.addr %s252, 8
      %s254 = scalar_lea.vmem %s0, %s253
      %s255 = smul.u32 8, %s19
      %s256 = smul.u32 8, %s19
      %p257 = scmp.lt.s32.totalorder %s256, 15
      %s258 = scalar_select %p257, %s256, 15
      %s259 = smul.addr %s258, 2
      %s260 = smul.addr %s259, 8
      %s261 = scalar_lea.vmem %s1, %s260
      %s262 = smul.u32 8, %s19
      %p263 = scmp.lt.s32.totalorder %s20, 0
      %s264 = scalar_select %p263, %s20, 0
      %s265 = smul.addr %s264, 8
      %s266 = scalar_lea.vmem %s2, %s265
      %p267 = scmp.lt.s32.totalorder %s20, 0
      %s268 = scalar_select %p267, %s20, 0
      %s269 = smul.addr %s268, 8
      %s270 = scalar_lea.vmem %s3, %s269
      %s271 = smul.u32 8, %s19
      %p272 = scmp.lt.s32.totalorder %s271, 15
      %s273 = scalar_select %p272, %s271, 15
      %p274 = scmp.lt.s32.totalorder %s20, 0
      %s275 = scalar_select %p274, %s20, 0
      %s276 = sadd.s32 %s275, %s273
      %s277 = smul.addr %s276, 8
      %s278 = scalar_lea.vmem %s4, %s277
      %s279 = smul.u32 8, %s19
      %v280 = vld [vmem:[%s254] sm:$0xff]
      %v281 = vld [vmem:[%s254 + $0x8] sm:$0xff]
      %v282 = vld [vmem:[%s254 + $0x10] sm:$0xff]
      %v283 = vld [vmem:[%s254 + $0x18] sm:$0xff]
      %v284 = vld [vmem:[%s254 + $0x20] sm:$0xff]
      %v285 = vld [vmem:[%s254 + $0x28] sm:$0xff]
      %v286 = vld [vmem:[%s254 + $0x30] sm:$0xff]
      %v287 = vld [vmem:[%s254 + $0x38] sm:$0xff]
      %v288 = vld [vmem:[%s266] sm:$0xff]
      %v289 = vld [vmem:[%s266 + $0x8] sm:$0xff]
      %v290 = vld [vmem:[%s266 + $0x10] sm:$0xff]
      %v291 = vld [vmem:[%s266 + $0x18] sm:$0xff]
      %v292 = vld [vmem:[%s261] sm:$0xff]
      %v293 = vld [vmem:[%s261 + $0x8] sm:$0xff]
      %v294 = vld [vmem:[%s261 + $0x10] sm:$0xff]
      %v295 = vld [vmem:[%s261 + $0x18] sm:$0xff]
      %v296 = vld [vmem:[%s261 + $0x20] sm:$0xff]
      %v297 = vld [vmem:[%s261 + $0x28] sm:$0xff]
      %v298 = vld [vmem:[%s261 + $0x30] sm:$0xff]
      %v299 = vld [vmem:[%s261 + $0x38] sm:$0xff]
      %v300 = vld [vmem:[%s261 + $0x40] sm:$0xff]
      %v301 = vld [vmem:[%s261 + $0x48] sm:$0xff]
      %v302 = vld [vmem:[%s261 + $0x50] sm:$0xff]
      %v303 = vld [vmem:[%s261 + $0x58] sm:$0xff]
      %v304 = vld [vmem:[%s261 + $0x60] sm:$0xff]
      %v305 = vld [vmem:[%s261 + $0x68] sm:$0xff]
      %v306 = vld [vmem:[%s261 + $0x70] sm:$0xff]
      %v307 = vld [vmem:[%s261 + $0x78] sm:$0xff]
      %v308 = vld [vmem:[%s270] sm:$0xff]
      %v309 = vld [vmem:[%s270 + $0x8] sm:$0xff]
      %v310 = vld [vmem:[%s270 + $0x10] sm:$0xff]
      %v311 = vld [vmem:[%s270 + $0x18] sm:$0xff]
      %v312 = vld [vmem:[%s270 + $0x20] sm:$0xff]
      %v313 = vld [vmem:[%s270 + $0x28] sm:$0xff]
      %v314 = vld [vmem:[%s270 + $0x30] sm:$0xff]
      %v315 = vld [vmem:[%s270 + $0x38] sm:$0xff]
      %v316 = vld [vmem:[%s270 + $0x40] sm:$0xff]
      %v317 = vld [vmem:[%s270 + $0x48] sm:$0xff]
      %v318 = vld [vmem:[%s270 + $0x50] sm:$0xff]
      %v319 = vld [vmem:[%s270 + $0x58] sm:$0xff]
      %v320 = vld [vmem:[%s270 + $0x60] sm:$0xff]
      %v321 = vld [vmem:[%s270 + $0x68] sm:$0xff]
      %v322 = vld [vmem:[%s270 + $0x70] sm:$0xff]
      %v323 = vld [vmem:[%s270 + $0x78] sm:$0xff]
      %v324 = vld [vmem:[%s270 + $0x80] sm:$0xff]
      %v325 = vld [vmem:[%s270 + $0x88] sm:$0xff]
      %v326 = vld [vmem:[%s270 + $0x90] sm:$0xff]
      %v327 = vld [vmem:[%s270 + $0x98] sm:$0xff]
      %v328 = vld [vmem:[%s270 + $0xa0] sm:$0xff]
      %v329 = vld [vmem:[%s270 + $0xa8] sm:$0xff]
      %v330 = vld [vmem:[%s270 + $0xb0] sm:$0xff]
      %v331 = vld [vmem:[%s270 + $0xb8] sm:$0xff]
      %v332 = vld [vmem:[%s270 + $0xc0] sm:$0xff]
      %v333 = vld [vmem:[%s270 + $0xc8] sm:$0xff]
      %v334 = vld [vmem:[%s270 + $0xd0] sm:$0xff]
      %v335 = vld [vmem:[%s270 + $0xd8] sm:$0xff]
      %v336 = vld [vmem:[%s270 + $0xe0] sm:$0xff]
      %v337 = vld [vmem:[%s270 + $0xe8] sm:$0xff]
      %v338 = vld [vmem:[%s270 + $0xf0] sm:$0xff]
      %v339 = vld [vmem:[%s270 + $0xf8] sm:$0xff]
      %340 = vmatpush.msra.mxu0 %v323
      %341 = vmatpush.msra.mxu0 %v322
      %342 = vmatpush.msra.mxu0 %v321
      %343 = vmatpush.msra.mxu0 %v320
      %344 = vmatpush.msra.mxu0 %v319
      %345 = vmatpush.msra.mxu0 %v318
      %346 = vmatpush.msra.mxu0 %v317
      %347 = vmatpush.msra.mxu0 %v316
      %348 = vmatpush.msra.mxu0 %v315
      %349 = vmatpush.msra.mxu0 %v314
      %350 = vmatpush.msra.mxu0 %v313
      %351 = vmatpush.msra.mxu0 %v312
      %352 = vmatpush.msra.mxu0 %v311
      %353 = vmatpush.msra.mxu0 %v310
      %354 = vmatpush.msra.mxu0 %v309
      %355 = vmatpush.msra.mxu0 %v308
      %356 = vmatmul.f32.gmra.mxu0 %v292
      %v357 = vpop.f32.mrf.mxu0
      %v358 = vadd.f32 0.0, %v357
      %359 = vmatmul.f32.gmra.mxu0 %v294
      %v360 = vpop.f32.mrf.mxu0
      %v361 = vadd.f32 0.0, %v360
      %362 = vmatmul.f32.gmra.mxu0 %v296
      %v363 = vpop.f32.mrf.mxu0
      %v364 = vadd.f32 0.0, %v363
      %365 = vmatmul.f32.gmra.mxu0 %v298
      %v366 = vpop.f32.mrf.mxu0
      %v367 = vadd.f32 0.0, %v366
      %368 = vmatmul.f32.gmra.mxu0 %v300
      %v369 = vpop.f32.mrf.mxu0
      %v370 = vadd.f32 0.0, %v369
      %371 = vmatmul.f32.gmra.mxu0 %v302
      %v372 = vpop.f32.mrf.mxu0
      %v373 = vadd.f32 0.0, %v372
      %374 = vmatmul.f32.gmra.mxu0 %v304
      %v375 = vpop.f32.mrf.mxu0
      %v376 = vadd.f32 0.0, %v375
      %377 = vmatmul.f32.gmra.mxu0 %v306
      %v378 = vpop.f32.mrf.mxu0
      %v379 = vadd.f32 0.0, %v378
      %380 = vdwg.mxu0
      %381 = vmatpush.msra.mxu0 %v339
      %382 = vmatpush.msra.mxu0 %v338
      %383 = vmatpush.msra.mxu0 %v337
      %384 = vmatpush.msra.mxu0 %v336
      %385 = vmatpush.msra.mxu0 %v335
      %386 = vmatpush.msra.mxu0 %v334
      %387 = vmatpush.msra.mxu0 %v333
      %388 = vmatpush.msra.mxu0 %v332
      %389 = vmatpush.msra.mxu0 %v331
      %390 = vmatpush.msra.mxu0 %v330
      %391 = vmatpush.msra.mxu0 %v329
      %392 = vmatpush.msra.mxu0 %v328
      %393 = vmatpush.msra.mxu0 %v327
      %394 = vmatpush.msra.mxu0 %v326
      %395 = vmatpush.msra.mxu0 %v325
      %396 = vmatpush.msra.mxu0 %v324
      %397 = vmatmul.f32.gmra.mxu0 %v293
      %v398 = vpop.f32.mrf.mxu0
      %v399 = vadd.f32 %v358, %v398
      %400 = vmatmul.f32.gmra.mxu0 %v295
      %v401 = vpop.f32.mrf.mxu0
      %v402 = vadd.f32 %v361, %v401
      %403 = vmatmul.f32.gmra.mxu0 %v297
      %v404 = vpop.f32.mrf.mxu0
      %v405 = vadd.f32 %v364, %v404
      %406 = vmatmul.f32.gmra.mxu0 %v299
      %v407 = vpop.f32.mrf.mxu0
      %v408 = vadd.f32 %v367, %v407
      %409 = vmatmul.f32.gmra.mxu0 %v301
      %v410 = vpop.f32.mrf.mxu0
      %v411 = vadd.f32 %v370, %v410
      %412 = vmatmul.f32.gmra.mxu0 %v303
      %v413 = vpop.f32.mrf.mxu0
      %v414 = vadd.f32 %v373, %v413
      %415 = vmatmul.f32.gmra.mxu0 %v305
      %v416 = vpop.f32.mrf.mxu0
      %v417 = vadd.f32 %v376, %v416
      %418 = vmatmul.f32.gmra.mxu0 %v307
      %v419 = vpop.f32.mrf.mxu0
      %v420 = vadd.f32 %v379, %v419
      %421 = vdwg.mxu0
      %vm422 = vcmask 261120
      %v424 = vsel %vm422, %v280, 0
      %v427 = vsel %vm422, %v281, 0
      %v430 = vsel %vm422, %v282, 0
      %v433 = vsel %vm422, %v283, 0
      %v436 = vsel %vm422, %v284, 0
      %v439 = vsel %vm422, %v285, 0
      %v442 = vsel %vm422, %v286, 0
      %v445 = vsel %vm422, %v287, 0
      %447 = vmatpush.msra.mxu0 0.0
      %448 = vmatpush.msra.mxu0 0.0
      %449 = vmatpush.msra.mxu0 0.0
      %450 = vmatpush.msra.mxu0 0.0
      %451 = vmatpush.msra.mxu0 0.0
      %452 = vmatpush.msra.mxu0 0.0
      %453 = vmatpush.msra.mxu0 0.0
      %454 = vmatpush.msra.mxu0 0.0
      %455 = vmatpush.msra.mxu0 0.0
      %456 = vmatpush.msra.mxu0 0.0
      %457 = vmatpush.msra.mxu0 0.0
      %458 = vmatpush.msra.mxu0 0.0
      %459 = vmatpush.msra.mxu0 %v291
      %460 = vmatpush.msra.mxu0 %v290
      %461 = vmatpush.msra.mxu0 %v289
      %462 = vmatpush.msra.mxu0 %v288
      %463 = vmatmul.f32.gmra.mxu0 %v424
      %v464 = vpop.f32.mrf.mxu0
      %v465 = vadd.f32 %v399, %v464
      %466 = vmatmul.f32.gmra.mxu0 %v427
      %v467 = vpop.f32.mrf.mxu0
      %v468 = vadd.f32 %v402, %v467
      %469 = vmatmul.f32.gmra.mxu0 %v430
      %v470 = vpop.f32.mrf.mxu0
      %v471 = vadd.f32 %v405, %v470
      %472 = vmatmul.f32.gmra.mxu0 %v433
      %v473 = vpop.f32.mrf.mxu0
      %v474 = vadd.f32 %v408, %v473
      %475 = vmatmul.f32.gmra.mxu0 %v436
      %v476 = vpop.f32.mrf.mxu0
      %v477 = vadd.f32 %v411, %v476
      %478 = vmatmul.f32.gmra.mxu0 %v439
      %v479 = vpop.f32.mrf.mxu0
      %v480 = vadd.f32 %v414, %v479
      %481 = vmatmul.f32.gmra.mxu0 %v442
      %v482 = vpop.f32.mrf.mxu0
      %v483 = vadd.f32 %v417, %v482
      %484 = vmatmul.f32.gmra.mxu0 %v445
      %v485 = vpop.f32.mrf.mxu0
      %v486 = vadd.f32 %v420, %v485
      %487 = vdwg.mxu0
      %v488 = vmax.f32 %v465, 0.0
      %v489 = vmax.f32 %v468, 0.0
      %v490 = vmax.f32 %v471, 0.0
      %v491 = vmax.f32 %v474, 0.0
      %v492 = vmax.f32 %v477, 0.0
      %v493 = vmax.f32 %v480, 0.0
      %v494 = vmax.f32 %v483, 0.0
      %v495 = vmax.f32 %v486, 0.0
      %vm496 = vcmask 523264
      %497 = vst.msk [vmem:[%s278] sm:$0xff] %vm496, %v488
      %498 = vst.msk [vmem:[%s278 + $0x8] sm:$0xff] %vm496, %v489
      %499 = vst.msk [vmem:[%s278 + $0x10] sm:$0xff] %vm496, %v490
      %500 = vst.msk [vmem:[%s278 + $0x18] sm:$0xff] %vm496, %v491
      %501 = vst.msk [vmem:[%s278 + $0x20] sm:$0xff] %vm496, %v492
      %502 = vst.msk [vmem:[%s278 + $0x28] sm:$0xff] %vm496, %v493
      %503 = vst.msk [vmem:[%s278 + $0x30] sm:$0xff] %vm496, %v494
      %504 = vst.msk [vmem:[%s278 + $0x38] sm:$0xff] %vm496, %v495
      %s505 = smul.u32 8, %s19
      %p506 = scmp.lt.s32.totalorder %s505, 15
      %s507 = scalar_select %p506, %s505, 15
      %p508 = scmp.lt.s32.totalorder %s20, 0
      %s509 = scalar_select %p508, %s20, 0
      %s510 = sadd.s32 %s509, %s507
      %s511 = smul.addr %s510, 8
      %s512 = scalar_lea.vmem %s4, %s511
      // Predicated region
      $region37: #{tpu_custom_call.1} parent=35 // pred_check
        %p513 = pneg %p151
      $region38: #{tpu_custom_call.1} parent=35 // pred_check_branch
        %515 = sbr.rel (%p513) target = $region40
      $region39: #{tpu_custom_call.1} parent=35 // pred_region
        %s516 = smul.u32 8, %s19
      $region40: #{tpu_custom_call.1} parent=35 // pred_fallthru
        _
    $region36: #{tpu_custom_call.1} parent=5 // pred_fallthru
      _
    %p517 = scmp.le.s32.totalorder 2, %s10
    // Predicated region
    $region41: #{tpu_custom_call.1} parent=5 // pred_check
      %p518 = pneg %p517
    $region42: #{tpu_custom_call.1} parent=5 // pred_check_branch
      %520 = sbr.rel (%p518) target = $region44
    $region43: #{tpu_custom_call.1} parent=5 // pred_region
      %s521 = ssub.s32 %s10, 2
      // Predicated region
      $region45: #{tpu_custom_call.1} parent=43 // pred_check
        %p522 = pneg %p157
      $region46: #{tpu_custom_call.1} parent=43 // pred_check_branch
        %524 = sbr.rel (%p522) target = $region48
      $region47: #{tpu_custom_call.1} parent=43 // pred_region
        %s525 = smul.u32 8, %s21
        %p526 = scmp.lt.s32.totalorder %s525, 15
        %s527 = scalar_select %p526, %s525, 15
        %p528 = scmp.lt.s32.totalorder %s22, 0
        %s529 = scalar_select %p528, %s22, 0
        %s530 = sadd.s32 %s529, %s527
        %s531 = smul.addr %s530, 8
        %s532 = scalar_lea.vmem %s4, %s531
      $region48: #{tpu_custom_call.1} parent=43 // pred_fallthru
        _
    $region44: #{tpu_custom_call.1} parent=5 // pred_fallthru
      _
  $region6: #{tpu_custom_call.1} parent=0 // loop_footer
    %s14 = sadd.s32 1, %s10
  $region7: #{tpu_custom_call.1} parent=0 // loop_footer_branch
    %9 = sbr.rel target = $region3
  $region8: #{tpu_custom_call.1} parent=0 // loop_exit
    _

// kernel: tpu_custom_call.1
$region0: #{tpu_custom_call.1}
  #allocation0 [shape = 'u32[]', space=smem, size = 0x4, offset = 0x4, fixed_abs, tag = 'smem constant byte address 0x4 - core index']
  #allocation1 [shape = 'u32[72,128]{1,0:T(1,128)}', space=vmem, size = 0x9000, scoped, tag = 'internal scratch']
  %s0 = inlined_call_operand.vmem [shape: f32[128,32], index: 0, kind: input, shape index: {}]
  %s1 = inlined_call_operand.vmem [shape: f32[128,256], index: 1, kind: input, shape index: {}]
  %s2 = inlined_call_operand.vmem [shape: f32[32,64], index: 2, kind: input, shape index: {}]
  %s3 = inlined_call_operand.vmem [shape: f32[256,64], index: 3, kind: input, shape index: {}]
  %s4 = inlined_call_operand.vmem [shape: f32[128,64], index: 4, kind: output, shape index: {}]
  %s5 = sld [smem:[#allocation0]]
  $region49: #{tpu_custom_call.1} parent=0
    _
  %s7 = ssub.s32 1, %s5
  %s8 = scalar_select 0, %s7, %s5
  loop: start=0, step=1, limit=4
  $region2: #{tpu_custom_call.1} parent=0 // loop_pre_header
    _
  $region3: #{tpu_custom_call.1} parent=0 // loop_header
    %s10 = sphi 0, %s14
    %p11 = scmp.ge.s32.totalorder %s10, 4
    %s17 = sphi 0, %s29
    %s18 = sphi 0, %s25
    %s19 = sphi 0, %s17
    %s20 = sphi 0, %s18
    %s21 = sphi 0, %s19
    %s22 = sphi 0, %s20
    %s32 = sphi 0, %s34
    %s35 = sphi 0, %s32
    %s36 = sphi 0, %s35
    %s52 = sphi 0, %s36
    %s58 = sphi 0, %s60
    %s61 = sphi 0, %s58
    %s62 = sphi 0, %s61
    %s78 = sphi 0, %s62
    %s84 = sphi 0, %s86
    %s87 = sphi 0, %s84
    %s88 = sphi 0, %s87
    %s104 = sphi 0, %s88
    %s110 = sphi 0, %s112
    %s113 = sphi 0, %s110
    %s114 = sphi 0, %s113
    %s130 = sphi 0, %s114
    %s138 = sphi 0, %s140
    %s141 = sphi 0, %s138
    %s142 = sphi 0, %s141
    %s158 = sphi 0, %s142
  $region4: #{tpu_custom_call.1} parent=0 // loop_header_branch
    %13 = sbr.rel (%p11) target = $region8
  $region5: #{tpu_custom_call.1} parent=0 // loop_body
    %s15 = ssub.s32 %s10, 1
    %s16 = ssub.s32 %s10, 2
    %s23 = sadd.s32 1, %s18
    %p24 = scmp.ge.s32.totalorder %s23, 1
    %s25 = scalar_select %p24, 0, %s23
    %s26 = sadd.s32 1, %s17
    %s27 = scalar_select %p24, %s26, %s17
    %p28 = scmp.ge.s32.totalorder %s27, 2
    %s29 = scalar_select %p28, 0, %s27
    %s30 = ssub.s32 %s17, %s29
    %p31 = scmp.eq.s32.totalorder %s30, 0
    %s33 = sadd.s32 %s32, 1
    %s34 = scalar_select %p31, %s32, %s33
    %p37 = pneg %p31
    %p38 = scmp.eq.s32.totalorder %s10, 1
    %p39 = por %p37, %p38
    %p40 = scmp.ne.s32.totalorder %s32, %s35
    %p41 = scmp.eq.s32.totalorder %s10, 0
    %p42 = por %p40, %p41
    %p43 = scmp.ne.s32.totalorder %s32, %s35
    %p44 = scmp.eq.s32.totalorder %s15, 1
    %p45 = por %p43, %p44
    %p46 = scmp.ne.s32.totalorder %s35, %s36
    %p47 = scmp.eq.s32.totalorder %s15, 0
    %p48 = por %p46, %p47
    %p49 = scmp.ne.s32.totalorder %s35, %s36
    %p50 = scmp.eq.s32.totalorder %s16, 1
    %p51 = por %p49, %p50
    %p53 = scmp.ne.s32.totalorder %s36, %s52
    %p54 = scmp.eq.s32.totalorder %s16, 0
    %p55 = por %p53, %p54
    %s56 = ssub.s32 %s17, %s29
    %p57 = scmp.eq.s32.totalorder %s56, 0
    %s59 = sadd.s32 %s58, 1
    %s60 = scalar_select %p57, %s58, %s59
    %p63 = pneg %p57
    %p64 = scmp.eq.s32.totalorder %s10, 1
    %p65 = por %p63, %p64
    %p66 = scmp.ne.s32.totalorder %s58, %s61
    %p67 = scmp.eq.s32.totalorder %s10, 0
    %p68 = por %p66, %p67
    %p69 = scmp.ne.s32.totalorder %s58, %s61
    %p70 = scmp.eq.s32.totalorder %s15, 1
    %p71 = por %p69, %p70
    %p72 = scmp.ne.s32.totalorder %s61, %s62
    %p73 = scmp.eq.s32.totalorder %s15, 0
    %p74 = por %p72, %p73
    %p75 = scmp.ne.s32.totalorder %s61, %s62
    %p76 = scmp.eq.s32.totalorder %s16, 1
    %p77 = por %p75, %p76
    %p79 = scmp.ne.s32.totalorder %s62, %s78
    %p80 = scmp.eq.s32.totalorder %s16, 0
    %p81 = por %p79, %p80
    %s82 = ssub.s32 %s18, %s25
    %p83 = scmp.eq.s32.totalorder %s82, 0
    %s85 = sadd.s32 %s84, 1
    %s86 = scalar_select %p83, %s84, %s85
    %p89 = pneg %p83
    %p90 = scmp.eq.s32.totalorder %s10, 1
    %p91 = por %p89, %p90
    %p92 = scmp.ne.s32.totalorder %s84, %s87
    %p93 = scmp.eq.s32.totalorder %s10, 0
    %p94 = por %p92, %p93
    %p95 = scmp.ne.s32.totalorder %s84, %s87
    %p96 = scmp.eq.s32.totalorder %s15, 1
    %p97 = por %p95, %p96
    %p98 = scmp.ne.s32.totalorder %s87, %s88
    %p99 = scmp.eq.s32.totalorder %s15, 0
    %p100 = por %p98, %p99
    %p101 = scmp.ne.s32.totalorder %s87, %s88
    %p102 = scmp.eq.s32.totalorder %s16, 1
    %p103 = por %p101, %p102
    %p105 = scmp.ne.s32.totalorder %s88, %s104
    %p106 = scmp.eq.s32.totalorder %s16, 0
    %p107 = por %p105, %p106
    %s108 = ssub.s32 %s18, %s25
    %p109 = scmp.eq.s32.totalorder %s108, 0
    %s111 = sadd.s32 %s110, 1
    %s112 = scalar_select %p109, %s110, %s111
    %p115 = pneg %p109
    %p116 = scmp.eq.s32.totalorder %s10, 1
    %p117 = por %p115, %p116
    %p118 = scmp.ne.s32.totalorder %s110, %s113
    %p119 = scmp.eq.s32.totalorder %s10, 0
    %p120 = por %p118, %p119
    %p121 = scmp.ne.s32.totalorder %s110, %s113
    %p122 = scmp.eq.s32.totalorder %s15, 1
    %p123 = por %p121, %p122
    %p124 = scmp.ne.s32.totalorder %s113, %s114
    %p125 = scmp.eq.s32.totalorder %s15, 0
    %p126 = por %p124, %p125
    %p127 = scmp.ne.s32.totalorder %s113, %s114
    %p128 = scmp.eq.s32.totalorder %s16, 1
    %p129 = por %p127, %p128
    %p131 = scmp.ne.s32.totalorder %s114, %s130
    %p132 = scmp.eq.s32.totalorder %s16, 0
    %p133 = por %p131, %p132
    %s134 = ssub.s32 %s17, %s29
    %s135 = ssub.s32 %s18, %s25
    %s136 = sor.u32 %s134, %s135
    %p137 = scmp.eq.s32.totalorder %s136, 0
    %s139 = sadd.s32 %s138, 1
    %s140 = scalar_select %p137, %s138, %s139
    %p143 = pneg %p137
    %p144 = scmp.eq.s32.totalorder %s10, 1
    %p145 = por %p143, %p144
    %p146 = scmp.ne.s32.totalorder %s138, %s141
    %p147 = scmp.eq.s32.totalorder %s10, 0
    %p148 = por %p146, %p147
    %p149 = scmp.ne.s32.totalorder %s138, %s141
    %p150 = scmp.eq.s32.totalorder %s15, 1
    %p151 = por %p149, %p150
    %p152 = scmp.ne.s32.totalorder %s141, %s142
    %p153 = scmp.eq.s32.totalorder %s15, 0
    %p154 = por %p152, %p153
    %p155 = scmp.ne.s32.totalorder %s141, %s142
    %p156 = scmp.eq.s32.totalorder %s16, 1
    %p157 = por %p155, %p156
    %p159 = scmp.ne.s32.totalorder %s142, %s158
    %p160 = scmp.eq.s32.totalorder %s16, 0
    %p161 = por %p159, %p160
    %p162 = scmp.le.s32.totalorder 1, %s10
    %p163 = scmp.lt.s32.totalorder %s10, 3
    %p164 = pnand %p162, %p163
    %p165 = pneg %p164
    // Predicated region
    $region9: #{tpu_custom_call.1} parent=5 // pred_check
      _
    $region10: #{tpu_custom_call.1} parent=5 // pred_check_branch
      %167 = sbr.rel (%p164) target = $region12
    $region11: #{tpu_custom_call.1} parent=5 // pred_region
      %s168 = ssub.s32 %s10, 1
      // Predicated region
      $region13: #{tpu_custom_call.1} parent=11 // pred_check
        %p169 = pneg %p100
      $region14: #{tpu_custom_call.1} parent=11 // pred_check_branch
        %171 = sbr.rel (%p169) target = $region16
      $region15: #{tpu_custom_call.1} parent=11 // pred_region
        %p172 = scmp.lt.s32.totalorder %s20, 0
        %s173 = scalar_select %p172, %s20, 0
        %s174 = smul.addr %s173, 8
        %s175 = scalar_lea.vmem %s2, %s174
      $region16: #{tpu_custom_call.1} parent=11 // pred_fallthru
        _
      // Predicated region
      $region17: #{tpu_custom_call.1} parent=11 // pred_check
        %p176 = pneg %p126
      $region18: #{tpu_custom_call.1} parent=11 // pred_check_branch
        %178 = sbr.rel (%p176) target = $region20
      $region19: #{tpu_custom_call.1} parent=11 // pred_region
        %p179 = scmp.lt.s32.totalorder %s20, 0
        %s180 = scalar_select %p179, %s20, 0
        %s181 = smul.addr %s180, 8
        %s182 = scalar_lea.vmem %s3, %s181
      $region20: #{tpu_custom_call.1} parent=11 // pred_fallthru
        _
    $region12: #{tpu_custom_call.1} parent=5 // pred_fallthru
      _
    %p183 = scmp.lt.s32.totalorder %s10, 2
    // Predicated region
    $region21: #{tpu_custom_call.1} parent=5 // pred_check
      %p184 = pneg %p183
    $region22: #{tpu_custom_call.1} parent=5 // pred_check_branch
      %186 = sbr.rel (%p184) target = $region24
    $region23: #{tpu_custom_call.1} parent=5 // pred_region
      // Predicated region
      $region25: #{tpu_custom_call.1} parent=23 // pred_check
        %p187 = pneg %p42
      $region26: #{tpu_custom_call.1} parent=23 // pred_check_branch
        %189 = sbr.rel (%p187) target = $region28
      $region27: #{tpu_custom_call.1} parent=23 // pred_region
        %s190 = smul.u32 8, %s17
        %p191 = scmp.lt.s32.totalorder %s190, 15
        %s192 = scalar_select %p191, %s190, 15
        %s193 = smul.addr %s192, 8
        %s194 = scalar_lea.vmem %s0, %s193
        %s195 = smul.u32 8, %s17
      $region28: #{tpu_custom_call.1} parent=23 // pred_fallthru
        _
      // Predicated region
      $region29: #{tpu_custom_call.1} parent=23 // pred_check
        %p196 = pneg %p68
      $region30: #{tpu_custom_call.1} parent=23 // pred_check_branch
        %198 = sbr.rel (%p196) target = $region32
      $region31: #{tpu_custom_call.1} parent=23 // pred_region
        %s199 = smul.u32 8, %s17
        %p200 = scmp.lt.s32.totalorder %s199, 15
        %s201 = scalar_select %p200, %s199, 15
        %s202 = smul.addr %s201, 2
        %s203 = smul.addr %s202, 8
        %s204 = scalar_lea.vmem %s1, %s203
        %s205 = smul.u32 8, %s17
      $region32: #{tpu_custom_call.1} parent=23 // pred_fallthru
        _
    $region24: #{tpu_custom_call.1} parent=5 // pred_fallthru
      _
    %p206 = scmp.le.s32.totalorder 1, %s10
    %p207 = scmp.lt.s32.totalorder %s10, 3
    %p208 = pnand %p206, %p207
    %p209 = pneg %p208
    // Predicated region
    $region33: #{tpu_custom_call.1} parent=5 // pred_check
      _
    $region34: #{tpu_custom_call.1} parent=5 // pred_check_branch
      %211 = sbr.rel (%p208) target = $region36
    $region35: #{tpu_custom_call.1} parent=5 // pred_region
      %s212 = ssub.s32 %s10, 1
      %s213 = smul.u32 8, %s19
      %p214 = scmp.lt.s32.totalorder %s213, 15
      %s215 = scalar_select %p214, %s213, 15
      %s216 = smul.addr %s215, 8
      %s217 = scalar_lea.vmem %s0, %s216
      %p218 = pneg %p48
      %p219 = pneg %p45
      %s220 = smul.u32 8, %s19
      %p221 = scmp.lt.s32.totalorder %s220, 15
      %s222 = scalar_select %p221, %s220, 15
      %s223 = smul.addr %s222, 2
      %s224 = smul.addr %s223, 8
      %s225 = scalar_lea.vmem %s1, %s224
      %p226 = pneg %p74
      %p227 = pneg %p71
      %p228 = scmp.lt.s32.totalorder %s20, 0
      %s229 = scalar_select %p228, %s20, 0
      %s230 = smul.addr %s229, 8
      %s231 = scalar_lea.vmem %s2, %s230
      %p232 = pneg %p100
      %p233 = pneg %p97
      %p234 = scmp.lt.s32.totalorder %s20, 0
      %s235 = scalar_select %p234, %s20, 0
      %s236 = smul.addr %s235, 8
      %s237 = scalar_lea.vmem %s3, %s236
      %p238 = pneg %p126
      %p239 = pneg %p123
      %p240 = pneg %p154
      %p241 = pneg %p151
      %s242 = smul.u32 8, %s19
      %p243 = scmp.lt.s32.totalorder %s242, 15
      %s244 = scalar_select %p243, %s242, 15
      %p245 = scmp.lt.s32.totalorder %s20, 0
      %s246 = scalar_select %p245, %s20, 0
      %s247 = sadd.s32 %s246, %s244
      %s248 = smul.addr %s247, 8
      %s249 = scalar_lea.vmem %s4, %s248
      %s250 = smul.u32 8, %s19
      %p251 = scmp.lt.s32.totalorder %s250, 15
      %s252 = scalar_select %p251, %s250, 15
      %s253 = smul.addr %s252, 8
      %s254 = scalar_lea.vmem %s0, %s253
      %s255 = smul.u32 8, %s19
      %s256 = smul.u32 8, %s19
      %p257 = scmp.lt.s32.totalorder %s256, 15
      %s258 = scalar_select %p257, %s256, 15
      %s259 = smul.addr %s258, 2
      %s260 = smul.addr %s259, 8
      %s261 = scalar_lea.vmem %s1, %s260
      %s262 = smul.u32 8, %s19
      %p263 = scmp.lt.s32.totalorder %s20, 0
      %s264 = scalar_select %p263, %s20, 0
      %s265 = smul.addr %s264, 8
      %s266 = scalar_lea.vmem %s2, %s265
      %p267 = scmp.lt.s32.totalorder %s20, 0
      %s268 = scalar_select %p267, %s20, 0
      %s269 = smul.addr %s268, 8
      %s270 = scalar_lea.vmem %s3, %s269
      %s271 = smul.u32 8, %s19
      %p272 = scmp.lt.s32.totalorder %s271, 15
      %s273 = scalar_select %p272, %s271, 15
      %p274 = scmp.lt.s32.totalorder %s20, 0
      %s275 = scalar_select %p274, %s20, 0
      %s276 = sadd.s32 %s275, %s273
      %s277 = smul.addr %s276, 8
      %s278 = scalar_lea.vmem %s4, %s277
      %s279 = smul.u32 8, %s19
      %v280 = vld [vmem:[%s254] sm:$0xff]
      %v281 = vld [vmem:[%s254 + $0x8] sm:$0xff]
      %v282 = vld [vmem:[%s254 + $0x10] sm:$0xff]
      %v283 = vld [vmem:[%s254 + $0x18] sm:$0xff]
      %v284 = vld [vmem:[%s254 + $0x20] sm:$0xff]
      %v285 = vld [vmem:[%s254 + $0x28] sm:$0xff]
      %v286 = vld [vmem:[%s254 + $0x30] sm:$0xff]
      %v287 = vld [vmem:[%s254 + $0x38] sm:$0xff]
      %v288 = vld [vmem:[%s266] sm:$0xff]
      %v289 = vld [vmem:[%s266 + $0x8] sm:$0xff]
      %v290 = vld [vmem:[%s266 + $0x10] sm:$0xff]
      %v291 = vld [vmem:[%s266 + $0x18] sm:$0xff]
      %v292 = vld [vmem:[%s261] sm:$0xff]
      %v293 = vld [vmem:[%s261 + $0x8] sm:$0xff]
      %v294 = vld [vmem:[%s261 + $0x10] sm:$0xff]
      %v295 = vld [vmem:[%s261 + $0x18] sm:$0xff]
      %v296 = vld [vmem:[%s261 + $0x20] sm:$0xff]
      %v297 = vld [vmem:[%s261 + $0x28] sm:$0xff]
      %v298 = vld [vmem:[%s261 + $0x30] sm:$0xff]
      %v299 = vld [vmem:[%s261 + $0x38] sm:$0xff]
      %v300 = vld [vmem:[%s261 + $0x40] sm:$0xff]
      %v301 = vld [vmem:[%s261 + $0x48] sm:$0xff]
      %v302 = vld [vmem:[%s261 + $0x50] sm:$0xff]
      %v303 = vld [vmem:[%s261 + $0x58] sm:$0xff]
      %v304 = vld [vmem:[%s261 + $0x60] sm:$0xff]
      %v305 = vld [vmem:[%s261 + $0x68] sm:$0xff]
      %v306 = vld [vmem:[%s261 + $0x70] sm:$0xff]
      %v307 = vld [vmem:[%s261 + $0x78] sm:$0xff]
      %v308 = vld [vmem:[%s270] sm:$0xff]
      %v309 = vld [vmem:[%s270 + $0x8] sm:$0xff]
      %v310 = vld [vmem:[%s270 + $0x10] sm:$0xff]
      %v311 = vld [vmem:[%s270 + $0x18] sm:$0xff]
      %v312 = vld [vmem:[%s270 + $0x20] sm:$0xff]
      %v313 = vld [vmem:[%s270 + $0x28] sm:$0xff]
      %v314 = vld [vmem:[%s270 + $0x30] sm:$0xff]
      %v315 = vld [vmem:[%s270 + $0x38] sm:$0xff]
      %v316 = vld [vmem:[%s270 + $0x40] sm:$0xff]
      %v317 = vld [vmem:[%s270 + $0x48] sm:$0xff]
      %v318 = vld [vmem:[%s270 + $0x50] sm:$0xff]
      %v319 = vld [vmem:[%s270 + $0x58] sm:$0xff]
      %v320 = vld [vmem:[%s270 + $0x60] sm:$0xff]
      %v321 = vld [vmem:[%s270 + $0x68] sm:$0xff]
      %v322 = vld [vmem:[%s270 + $0x70] sm:$0xff]
      %v323 = vld [vmem:[%s270 + $0x78] sm:$0xff]
      %v324 = vld [vmem:[%s270 + $0x80] sm:$0xff]
      %v325 = vld [vmem:[%s270 + $0x88] sm:$0xff]
      %v326 = vld [vmem:[%s270 + $0x90] sm:$0xff]
      %v327 = vld [vmem:[%s270 + $0x98] sm:$0xff]
      %v328 = vld [vmem:[%s270 + $0xa0] sm:$0xff]
      %v329 = vld [vmem:[%s270 + $0xa8] sm:$0xff]
      %v330 = vld [vmem:[%s270 + $0xb0] sm:$0xff]
      %v331 = vld [vmem:[%s270 + $0xb8] sm:$0xff]
      %v332 = vld [vmem:[%s270 + $0xc0] sm:$0xff]
      %v333 = vld [vmem:[%s270 + $0xc8] sm:$0xff]
      %v334 = vld [vmem:[%s270 + $0xd0] sm:$0xff]
      %v335 = vld [vmem:[%s270 + $0xd8] sm:$0xff]
      %v336 = vld [vmem:[%s270 + $0xe0] sm:$0xff]
      %v337 = vld [vmem:[%s270 + $0xe8] sm:$0xff]
      %v338 = vld [vmem:[%s270 + $0xf0] sm:$0xff]
      %v339 = vld [vmem:[%s270 + $0xf8] sm:$0xff]
      %340 = vmatpush.msra.mxu0 %v323
      %341 = vmatpush.msra.mxu0 %v322
      %342 = vmatpush.msra.mxu0 %v321
      %343 = vmatpush.msra.mxu0 %v320
      %344 = vmatpush.msra.mxu0 %v319
      %345 = vmatpush.msra.mxu0 %v318
      %346 = vmatpush.msra.mxu0 %v317
      %347 = vmatpush.msra.mxu0 %v316
      %348 = vmatpush.msra.mxu0 %v315
      %349 = vmatpush.msra.mxu0 %v314
      %350 = vmatpush.msra.mxu0 %v313
      %351 = vmatpush.msra.mxu0 %v312
      %352 = vmatpush.msra.mxu0 %v311
      %353 = vmatpush.msra.mxu0 %v310
      %354 = vmatpush.msra.mxu0 %v309
      %355 = vmatpush.msra.mxu0 %v308
      %356 = vmatmul.f32.gmra.mxu0 %v292
      %v357 = vpop.f32.mrf.mxu0
      %v358 = vadd.f32 0.0, %v357
      %359 = vmatmul.f32.gmra.mxu0 %v294
      %v360 = vpop.f32.mrf.mxu0
      %v361 = vadd.f32 0.0, %v360
      %362 = vmatmul.f32.gmra.mxu0 %v296
      %v363 = vpop.f32.mrf.mxu0
      %v364 = vadd.f32 0.0, %v363
      %365 = vmatmul.f32.gmra.mxu0 %v298
      %v366 = vpop.f32.mrf.mxu0
      %v367 = vadd.f32 0.0, %v366
      %368 = vmatmul.f32.gmra.mxu0 %v300
      %v369 = vpop.f32.mrf.mxu0
      %v370 = vadd.f32 0.0, %v369
      %371 = vmatmul.f32.gmra.mxu0 %v302
      %v372 = vpop.f32.mrf.mxu0
      %v373 = vadd.f32 0.0, %v372
      %374 = vmatmul.f32.gmra.mxu0 %v304
      %v375 = vpop.f32.mrf.mxu0
      %v376 = vadd.f32 0.0, %v375
      %377 = vmatmul.f32.gmra.mxu0 %v306
      %v378 = vpop.f32.mrf.mxu0
      %v379 = vadd.f32 0.0, %v378
      %380 = vdwg.mxu0
      %381 = vmatpush.msra.mxu0 %v339
      %382 = vmatpush.msra.mxu0 %v338
      %383 = vmatpush.msra.mxu0 %v337
      %384 = vmatpush.msra.mxu0 %v336
      %385 = vmatpush.msra.mxu0 %v335
      %386 = vmatpush.msra.mxu0 %v334
      %387 = vmatpush.msra.mxu0 %v333
      %388 = vmatpush.msra.mxu0 %v332
      %389 = vmatpush.msra.mxu0 %v331
      %390 = vmatpush.msra.mxu0 %v330
      %391 = vmatpush.msra.mxu0 %v329
      %392 = vmatpush.msra.mxu0 %v328
      %393 = vmatpush.msra.mxu0 %v327
      %394 = vmatpush.msra.mxu0 %v326
      %395 = vmatpush.msra.mxu0 %v325
      %396 = vmatpush.msra.mxu0 %v324
      %397 = vmatmul.f32.gmra.mxu0 %v293
      %v398 = vpop.f32.mrf.mxu0
      %v399 = vadd.f32 %v358, %v398
      %400 = vmatmul.f32.gmra.mxu0 %v295
      %v401 = vpop.f32.mrf.mxu0
      %v402 = vadd.f32 %v361, %v401
      %403 = vmatmul.f32.gmra.mxu0 %v297
      %v404 = vpop.f32.mrf.mxu0
      %v405 = vadd.f32 %v364, %v404
      %406 = vmatmul.f32.gmra.mxu0 %v299
      %v407 = vpop.f32.mrf.mxu0
      %v408 = vadd.f32 %v367, %v407
      %409 = vmatmul.f32.gmra.mxu0 %v301
      %v410 = vpop.f32.mrf.mxu0
      %v411 = vadd.f32 %v370, %v410
      %412 = vmatmul.f32.gmra.mxu0 %v303
      %v413 = vpop.f32.mrf.mxu0
      %v414 = vadd.f32 %v373, %v413
      %415 = vmatmul.f32.gmra.mxu0 %v305
      %v416 = vpop.f32.mrf.mxu0
      %v417 = vadd.f32 %v376, %v416
      %418 = vmatmul.f32.gmra.mxu0 %v307
      %v419 = vpop.f32.mrf.mxu0
      %v420 = vadd.f32 %v379, %v419
      %421 = vdwg.mxu0
      %vm422 = vcmask 261120
      %v424 = vsel %vm422, %v280, 0
      %v427 = vsel %vm422, %v281, 0
      %v430 = vsel %vm422, %v282, 0
      %v433 = vsel %vm422, %v283, 0
      %v436 = vsel %vm422, %v284, 0
      %v439 = vsel %vm422, %v285, 0
      %v442 = vsel %vm422, %v286, 0
      %v445 = vsel %vm422, %v287, 0
      %447 = vmatpush.msra.mxu0 0.0
      %448 = vmatpush.msra.mxu0 0.0
      %449 = vmatpush.msra.mxu0 0.0
      %450 = vmatpush.msra.mxu0 0.0
      %451 = vmatpush.msra.mxu0 0.0
      %452 = vmatpush.msra.mxu0 0.0
      %453 = vmatpush.msra.mxu0 0.0
      %454 = vmatpush.msra.mxu0 0.0
      %455 = vmatpush.msra.mxu0 0.0
      %456 = vmatpush.msra.mxu0 0.0
      %457 = vmatpush.msra.mxu0 0.0
      %458 = vmatpush.msra.mxu0 0.0
      %459 = vmatpush.msra.mxu0 %v291
      %460 = vmatpush.msra.mxu0 %v290
      %461 = vmatpush.msra.mxu0 %v289
      %462 = vmatpush.msra.mxu0 %v288
      %463 = vmatmul.f32.gmra.mxu0 %v424
      %v464 = vpop.f32.mrf.mxu0
      %v465 = vadd.f32 %v399, %v464
      %466 = vmatmul.f32.gmra.mxu0 %v427
      %v467 = vpop.f32.mrf.mxu0
      %v468 = vadd.f32 %v402, %v467
      %469 = vmatmul.f32.gmra.mxu0 %v430
      %v470 = vpop.f32.mrf.mxu0
      %v471 = vadd.f32 %v405, %v470
      %472 = vmatmul.f32.gmra.mxu0 %v433
      %v473 = vpop.f32.mrf.mxu0
      %v474 = vadd.f32 %v408, %v473
      %475 = vmatmul.f32.gmra.mxu0 %v436
      %v476 = vpop.f32.mrf.mxu0
      %v477 = vadd.f32 %v411, %v476
      %478 = vmatmul.f32.gmra.mxu0 %v439
      %v479 = vpop.f32.mrf.mxu0
      %v480 = vadd.f32 %v414, %v479
      %481 = vmatmul.f32.gmra.mxu0 %v442
      %v482 = vpop.f32.mrf.mxu0
      %v483 = vadd.f32 %v417, %v482
      %484 = vmatmul.f32.gmra.mxu0 %v445
      %v485 = vpop.f32.mrf.mxu0
      %v486 = vadd.f32 %v420, %v485
      %487 = vdwg.mxu0
      %v488 = vmax.f32 %v465, 0.0
      %v489 = vmax.f32 %v468, 0.0
      %v490 = vmax.f32 %v471, 0.0
      %v491 = vmax.f32 %v474, 0.0
      %v492 = vmax.f32 %v477, 0.0
      %v493 = vmax.f32 %v480, 0.0
      %v494 = vmax.f32 %v483, 0.0
      %v495 = vmax.f32 %v486, 0.0
      %vm496 = vcmask 523264
      %497 = vst.msk [vmem:[%s278] sm:$0xff] %vm496, %v488
      %498 = vst.msk [vmem:[%s278 + $0x8] sm:$0xff] %vm496, %v489
      %499 = vst.msk [vmem:[%s278 + $0x10] sm:$0xff] %vm496, %v490
      %500 = vst.msk [vmem:[%s278 + $0x18] sm:$0xff] %vm496, %v491
      %501 = vst.msk [vmem:[%s278 + $0x20] sm:$0xff] %vm496, %v492
      %502 = vst.msk [vmem:[%s278 + $0x28] sm:$0xff] %vm496, %v493
      %503 = vst.msk [vmem:[%s278 + $0x30] sm:$0xff] %vm496, %v494
      %504 = vst.msk [vmem:[%s278 + $0x38] sm:$0xff] %vm496, %v495
      %s505 = smul.u32 8, %s19
      %p506 = scmp.lt.s32.totalorder %s505, 15
      %s507 = scalar_select %p506, %s505, 15
      %p508 = scmp.lt.s32.totalorder %s20, 0
      %s509 = scalar_select %p508, %s20, 0
      %s510 = sadd.s32 %s509, %s507
      %s511 = smul.addr %s510, 8
      %s512 = scalar_lea.vmem %s4, %s511
      // Predicated region
      $region37: #{tpu_custom_call.1} parent=35 // pred_check
        %p513 = pneg %p151
      $region38: #{tpu_custom_call.1} parent=35 // pred_check_branch
        %515 = sbr.rel (%p513) target = $region40
      $region39: #{tpu_custom_call.1} parent=35 // pred_region
        %s516 = smul.u32 8, %s19
      $region40: #{tpu_custom_call.1} parent=35 // pred_fallthru
        _
    $region36: #{tpu_custom_call.1} parent=5 // pred_fallthru
      _
    %p517 = scmp.le.s32.totalorder 2, %s10
    // Predicated region
    $region41: #{tpu_custom_call.1} parent=5 // pred_check
      %p518 = pneg %p517
    $region42: #{tpu_custom_call.1} parent=5 // pred_check_branch
      %520 = sbr.rel (%p518) target = $region44
    $region43: #{tpu_custom_call.1} parent=5 // pred_region
      %s521 = ssub.s32 %s10, 2
      // Predicated region
      $region45: #{tpu_custom_call.1} parent=43 // pred_check
        %p522 = pneg %p157
      $region46: #{tpu_custom_call.1} parent=43 // pred_check_branch
        %524 = sbr.rel (%p522) target = $region48
      $region47: #{tpu_custom_call.1} parent=43 // pred_region
        %s525 = smul.u32 8, %s21
        %p526 = scmp.lt.s32.totalorder %s525, 15
        %s527 = scalar_select %p526, %s525, 15
        %p528 = scmp.lt.s32.totalorder %s22, 0
        %s529 = scalar_select %p528, %s22, 0
        %s530 = sadd.s32 %s529, %s527
        %s531 = smul.addr %s530, 8
        %s532 = scalar_lea.vmem %s4, %s531
      $region48: #{tpu_custom_call.1} parent=43 // pred_fallthru
        _
    $region44: #{tpu_custom_call.1} parent=5 // pred_fallthru
      _
  $region6: #{tpu_custom_call.1} parent=0 // loop_footer
    %s14 = sadd.s32 1, %s10
  $region7: #{tpu_custom_call.1} parent=0 // loop_footer_branch
    %9 = sbr.rel target = $region3
  $region8: #{tpu_custom_call.1} parent=0 // loop_exit
    _

</llo_original>
